<compile_context>
chip_gen: v5e
topology: v5e:2x2
jax: 0.10.0
libtpu: 0.0.40
codegen_flags: <defaults>
</compile_context>

<pallas_src>
import jax
import jax.numpy as jnp
from jax.experimental import pallas as pl
from jax.experimental.pallas import tpu as pltpu

EPS = 1e-12  # matches torch.nn.functional.normalize default eps


def _largest_tile(n, cap):
    """Largest tile <= cap dividing n, preferring 256/128/8-aligned tiles."""
    if n <= cap:
        return n
    for align in (256, 128, 8):  # 256-granular keeps v6e/v7x MXUs full
        start = (cap // align) * align
        for t in range(start, 0, -align):
            if n % t == 0:
                return t
    # TODO(synk): ragged N with no aligned divisor falls back to a full-N tile;
    # a masked edge tile would be needed to bound VMEM in that case.
    return n


def _pick_bt(b, cap):
    """Largest divisor of b <= cap, preferring an even number of grid blocks
    (b // bt even) so both v7x TensorCores stay busy."""
    cap = max(1, min(cap, b))
    divisors = [d for d in range(1, cap + 1) if b % d == 0]
    even = [d for d in divisors if (b // d) % 2 == 0]
    return max(even) if even else max(divisors)


def _vmem_capacity_bytes():
    try:
        info = pltpu.get_tpu_info()
        cap = getattr(info, "vmem_capacity_bytes", None)
        if cap:
            return int(cap)
    except Exception:
        pass
    return 64 * 1024 * 1024  # conservative default (v7x physical VMEM)


def _make_netvlad_kernel(bt, mxu_dtype, kp_major):
    unroll = bt <= 2

    def kernel(x_ref, w_ref, b_ref, mu_ref, o_ref, asum_ref):
        n = pl.program_id(1)

        @pl.when(n == 0)
        def _init():
            o_ref[...] = jnp.zeros_like(o_ref)
            asum_ref[...] = jnp.zeros_like(asum_ref)

        w = w_ref[...]                 # (D, KP), already mxu_dtype
        bias = b_ref[...]              # (1, KP) f32, padded lanes = -1e30

        def acc_body(bi, carry):
            x = x_ref[bi].astype(mxu_dtype)            # (TN, D)

            # Soft-assignment: softmax over the (lane-dense) padded clusters.
            logits = jnp.dot(x, w, preferred_element_type=jnp.float32) + bias
            logits = logits - jnp.max(logits, axis=-1, keepdims=True)
            e = jnp.exp(logits)
            a = e * pl.reciprocal(jnp.sum(e, axis=-1, keepdims=True),
                                  approx=True)         # (TN, KP) f32
            a_lo = a.astype(mxu_dtype)

            if kp_major:
                # o[k, d] += sum_n a[n, k] * x[n, d]
                delta = jax.lax.dot_general(
                    a_lo, x, dimension_numbers=(((0,), (0,)), ((), ())),
                    preferred_element_type=jnp.float32)          # (KP, D)
            else:
                # o[d, k] += sum_n x[n, d] * a[n, k]
                delta = jax.lax.dot_general(
                    x, a_lo, dimension_numbers=(((0,), (0,)), ((), ())),
                    preferred_element_type=jnp.float32)          # (D, KP)
            o_ref[bi] += delta
            asum_ref[bi] += jnp.sum(a, axis=0, keepdims=True)    # (1, KP)
            return carry

        jax.lax.fori_loop(0, bt, acc_body, 0, unroll=unroll)

        @pl.when(n == pl.num_programs(1) - 1)
        def _finalize():
            mu = mu_ref[...].astype(jnp.float32)                 # (D, KP)

            def fin_body(bi, carry):
                asum = asum_ref[bi]                              # (1, KP)
                corr = asum * mu                                 # (D, KP)
                if kp_major:
                    # Aligned (D,KP)->(KP,D) transpose once per batch element.
                    vlad = o_ref[bi] - jnp.transpose(corr)       # (KP, D)
                    ss = jnp.sum(vlad * vlad, axis=-1, keepdims=True)  # (KP,1)
                else:
                    vlad = o_ref[bi] - corr                      # (D, KP)
                    ss = jnp.sum(vlad * vlad, axis=0, keepdims=True)   # (1,KP)
                # Intra-normalization: x * rsqrt(max(ss, eps^2)) ==
                # x / max(||x||, eps) (torch F.normalize semantics).
                inv = jax.lax.rsqrt(jnp.maximum(ss, EPS * EPS))
                vlad = vlad * inv
                # Global L2 from the per-cluster sums (no full re-square);
                # padded clusters are exactly zero and contribute nothing.
                gss = jnp.sum(ss * inv * inv)
                vlad = vlad * jax.lax.rsqrt(jnp.maximum(gss, EPS * EPS))
                o_ref[bi] = vlad.astype(o_ref.dtype)
                return carry

            jax.lax.fori_loop(0, bt, fin_body, 0, unroll=unroll)

    return kernel


def netvlad_forward(x, w, b, mu, dim=1, flatten=True, mxu_dtype=jnp.bfloat16,
                    tn_cap=1024, bt_cap=8):
    """NetVLAD forward.

    x  : array whose `dim` axis holds descriptors; last axis = features (D).
    w  : (D, K) assignment Linear weight (transposed), b: (K,), mu: (K, D).
    mxu_dtype: matmul operand dtype.  bfloat16 (default) runs the MXU at
      native rate on v5e/v6e/v7x with f32 accumulation; pass jnp.float32 for
      exact matmul semantics (x is quantized to mxu_dtype inside the kernel).
    Returns [B, K*D] (flatten=True) or [B, K, D].
    """
    x = jnp.moveaxis(x, dim, -2)               # -> [B, N, D]
    assert x.ndim == 3, "wrapper supports a single leading batch dim"
    B, N, D = x.shape
    K = mu.shape[0]
    mxu_dtype = jnp.dtype(mxu_dtype)

    # Lane-dense cluster axis: pad K to a multiple of 128.  Padded clusters get
    # bias -1e30 (zero softmax mass; requires the f32 logits accumulate) and
    # zero centers, so they contribute exactly nothing to VLAD or its norms.
    KP = ((K + 127) // 128) * 128
    w_p = jnp.zeros((D, KP), mxu_dtype).at[:, :K].set(w.astype(mxu_dtype))
    b_p = jnp.full((1, KP), -1e30, jnp.float32).at[0, :K].set(
        b.astype(jnp.float32).reshape(K))
    mu_t = jnp.zeros((D, KP), mxu_dtype).at[:, :K].set(mu.T.astype(mxu_dtype))

    # Accumulator orientation: (KP, D) when D is lane-dense (kills the
    # post-kernel swapaxes HBM pass), else (D, KP) keeps the output lane-dense.
    kp_major = (D % 128 == 0)

    # Tiling: stream N ("arbitrary", last grid axis); BT batch elements per
    # step amortize the ~0.35us per-step overhead.  Generation-aware budgets.
    vmem_cap = _vmem_capacity_bytes()
    big_vmem = vmem_cap > (96 << 20)            # v5e / v6e (128 MiB VMEM)
    x_budget = (20 << 20) if big_vmem else (8 << 20)
    esize_x = jnp.dtype(x.dtype).itemsize
    TN = _largest_tile(N, min(tn_cap, max(8, x_budget // max(1, 2 * D * esize_x))))
    bt_budget = max(1, x_budget // max(1, 2 * TN * D * esize_x))
    BT = _pick_bt(B, min(bt_cap, bt_budget, max(1, B // 2)))
    grid = (B // BT, N // TN)

    out_shape = (B, KP, D) if kp_major else (B, D, KP)
    out_block = (BT, KP, D) if kp_major else (BT, D, KP)

    # VMEM footprint estimate (double-buffered inputs/outputs) + headroom,
    # capped at 75% of physical VMEM (leaves slack for compiler scratch,
    # particularly on v7x's 64 MiB).
    esize_m = mxu_dtype.itemsize
    need = (2 * BT * TN * D * esize_x          # x double-buffer
            + 2 * 2 * D * KP * esize_m         # W + mu^T (2 buffers each)
            + 2 * KP * 4                       # bias
            + 2 * BT * D * KP * 4              # resident output / accumulator
            + BT * 8 * KP * 4)                 # a-sum scratch (sublane-padded)
    vmem_limit = int(min(max(2 * need, 32 << 20), int(0.75 * vmem_cap)))

    out = pl.pallas_call(
        _make_netvlad_kernel(BT, mxu_dtype, kp_major),
        out_shape=jax.ShapeDtypeStruct(out_shape, jnp.float32),
        grid_spec=pltpu.PrefetchScalarGridSpec(
            num_scalar_prefetch=0,
            grid=grid,
            in_specs=[
                pl.BlockSpec((BT, TN, D), lambda bb, nn: (bb, nn, 0)),  # x
                pl.BlockSpec((D, KP), lambda bb, nn: (0, 0)),           # W
                pl.BlockSpec((1, KP), lambda bb, nn: (0, 0)),           # bias
                pl.BlockSpec((D, KP), lambda bb, nn: (0, 0)),           # mu^T
            ],
            out_specs=pl.BlockSpec(out_block, lambda bb, nn: (bb, 0, 0)),
            scratch_shapes=[pltpu.VMEM((BT, 1, KP), jnp.float32)],      # sum_n a
        ),
        compiler_params=pltpu.CompilerParams(
            dimension_semantics=("parallel", "arbitrary"),
            vmem_limit_bytes=vmem_limit,
        ),
    )(x, w_p, b_p, mu_t)

    if kp_major:
        vlad = out[:, :K, :]                          # (B, K, D), k-major
    else:
        vlad = jnp.swapaxes(out, 1, 2)[:, :K, :]      # (B, K, D)
    return vlad.reshape(B, K * D) if flatten else vlad


def _netvlad_ref(x, w, b, mu, dim=1, eps=EPS):
    """Pure-JAX reference (canonical NetVLAD) for correctness checking."""
    x = jnp.moveaxis(x, dim, -2).astype(jnp.float32)
    a = jax.nn.softmax(jnp.einsum('bnd,dk->bnk', x, w) + b, axis=-1)
    vlad = jnp.einsum('bnk,bnd->bkd', a, x) - a.sum(1)[..., None] * mu[None]
    vlad = vlad / jnp.maximum(
        jnp.linalg.norm(vlad, axis=-1, keepdims=True), eps)
    flat = vlad.reshape(vlad.shape[0], -1)
    return flat / jnp.maximum(jnp.linalg.norm(flat, axis=-1, keepdims=True), eps)


if __name__ == "__main__":
    key = jax.random.PRNGKey(0)

    def make_case(k, B, N, D, K):
        kx, kw, kb, km = jax.random.split(k, 4)
        x = jax.random.normal(kx, (B, N, D), dtype=jnp.float32)
        bound = 1.0 / float(D) ** 0.5
        w = jax.random.uniform(kw, (D, K), jnp.float32, -bound, bound)  # W^T
        b = jax.random.uniform(kb, (K,), jnp.float32, -bound, bound)
        mu = jax.random.uniform(km, (K, D), jnp.float32, 0.0, 1.0)      # torch.rand
        return x, w, b, mu

    k1, k2 = jax.random.split(key)

    # Case 1: module-sized shapes (input_size=32, nb_cluster=8, batch=2,
    # 16 descriptors along dim=1); default bf16 matmuls, (D, KP) orientation.
    B, N, D, K = 2, 16, 32, 8
    x, w, b, mu = make_case(k1, B, N, D, K)
    out = netvlad_forward(x, w, b, mu, dim=1, flatten=True)
    jax.block_until_ready(out)
    assert out.shape == (B, K * D)
    err = float(jnp.max(jnp.abs(out - _netvlad_ref(x, w, b, mu, dim=1))))
    assert err < 2.5e-2, f"bf16 path: max |kernel - ref| = {err}"

    # Case 2: lane-dense feature dim (D=128) exercises the (KP, D) orientation
    # (no post-kernel transpose); f32 matmuls for a tight tolerance.
    B, N, D, K = 4, 64, 128, 16
    x, w, b, mu = make_case(k2, B, N, D, K)
    out = netvlad_forward(x, w, b, mu, dim=1, flatten=True,
                          mxu_dtype=jnp.float32)
    jax.block_until_ready(out)
    assert out.shape == (B, K * D)
    err = float(jnp.max(jnp.abs(out - _netvlad_ref(x, w, b, mu, dim=1))))
    assert err < 5e-3, f"f32 path: max |kernel - ref| = {err}"

    print("KERNEL_OK")
</pallas_src>

<mosaic_0001>
module attributes {stable_mosaic.version = 11 : i64} {
  func.func @kernel(%arg0: i32, %arg1: i32, %arg2: memref<1x16x32xf32, #tpu.memory_space<vmem>>, %arg3: memref<32x128xbf16, #tpu.memory_space<vmem>>, %arg4: memref<1x128xf32, #tpu.memory_space<vmem>>, %arg5: memref<32x128xbf16, #tpu.memory_space<vmem>>, %arg6: memref<1x32x128xf32, #tpu.memory_space<vmem>>, %arg7: memref<1x1x128xf32, #tpu.memory_space<vmem>>) attributes {dimension_semantics = [#tpu.dimension_semantics<parallel>, #tpu.dimension_semantics<arbitrary>], iteration_bounds = array<i64: 2, 1>, scalar_prefetch = 0 : i64, scratch_operands = 1 : i64, tpu.core_type = #tpu.core_type<tc>, window_params = [{transform_indices = @transform_0, window_bounds = array<i64: 1, 16, 32>}, {pipeline_mode = #tpu.pipeline_mode<synchronous>, transform_indices = @transform_1, window_bounds = array<i64: 32, 128>}, {pipeline_mode = #tpu.pipeline_mode<synchronous>, transform_indices = @transform_2, window_bounds = array<i64: 1, 128>}, {pipeline_mode = #tpu.pipeline_mode<synchronous>, transform_indices = @transform_3, window_bounds = array<i64: 32, 128>}, {transform_indices = @transform_4, window_bounds = array<i64: 1, 32, 128>}]} {
    %c0_i32 = arith.constant 0 : i32
    %0 = arith.cmpi eq, %arg1, %c0_i32 : i32
    %1 = arith.extui %0 : i1 to i32
    %c0_i32_0 = arith.constant 0 : i32
    %2 = arith.cmpi ne, %1, %c0_i32_0 : i32
    scf.if %2 {
      %cst_21 = arith.constant 0.000000e+00 : f32
      %45 = vector.broadcast %cst_21 : f32 to vector<1x32x128xf32>
      %c0_22 = arith.constant 0 : index
      %c0_23 = arith.constant 0 : index
      %c0_24 = arith.constant 0 : index
      %46 = vector.load %arg6[%c0_22, %c0_23, %c0_24] : memref<1x32x128xf32, #tpu.memory_space<vmem>>, vector<1x32x128xf32>
      tpu.vector_store %arg6[%c0_22, %c0_23, %c0_24], %45 {strides = array<i32>} : memref<1x32x128xf32, #tpu.memory_space<vmem>>, vector<1x32x128xf32>,
      %cst_25 = arith.constant 0.000000e+00 : f32
      %47 = vector.broadcast %cst_25 : f32 to vector<1x1x128xf32>
      %c0_26 = arith.constant 0 : index
      %c0_27 = arith.constant 0 : index
      %c0_28 = arith.constant 0 : index
      %48 = vector.load %arg7[%c0_26, %c0_27, %c0_28] : memref<1x1x128xf32, #tpu.memory_space<vmem>>, vector<1x1x128xf32>
      tpu.vector_store %arg7[%c0_26, %c0_27, %c0_28], %47 {strides = array<i32>} : memref<1x1x128xf32, #tpu.memory_space<vmem>>, vector<1x1x128xf32>,
    } else {
    }
    %c0 = arith.constant 0 : index
    %c0_1 = arith.constant 0 : index
    %3 = vector.load %arg3[%c0, %c0_1] : memref<32x128xbf16, #tpu.memory_space<vmem>>, vector<32x128xbf16>
    %c0_2 = arith.constant 0 : index
    %c0_3 = arith.constant 0 : index
    %4 = vector.load %arg4[%c0_2, %c0_3] : memref<1x128xf32, #tpu.memory_space<vmem>>, vector<1x128xf32>
    %c0_i32_4 = arith.constant 0 : i32
    %5 = arith.index_cast %c0_i32_4 : i32 to index
    %c0_5 = arith.constant 0 : index
    %c0_6 = arith.constant 0 : index
    %6 = vector.load %arg2[%5, %c0_5, %c0_6] : memref<1x16x32xf32, #tpu.memory_space<vmem>>, vector<1x16x32xf32>
    %7 = vector.shape_cast %6 : vector<1x16x32xf32> to vector<16x32xf32>
    %8 = arith.truncf %7 : vector<16x32xf32> to vector<16x32xbf16>
    %cst = arith.constant dense<0.000000e+00> : vector<16x128xf32>
    %9 = tpu.matmul %8, %3, %cst {dimension_numbers = #tpu.dot_dimension_numbers<[1], [0], [0], [1], [0, 0, 1, 1], [], []>} : vector<16x32xbf16>, vector<32x128xbf16>, vector<16x128xf32> -> vector<16x128xf32>
    %10 = vector.broadcast %4 : vector<1x128xf32> to vector<16x128xf32>
    %11 = arith.addf %9, %10 : vector<16x128xf32>
    %cst_7 = arith.constant dense<0xFF800000> : vector<16xf32>
    %12 = vector.multi_reduction <maximumf>, %11, %cst_7 [1] : vector<16x128xf32> to vector<16xf32>
    %13 = vector.shape_cast %12 : vector<16xf32> to vector<16x1xf32>
    %14 = vector.broadcast %13 : vector<16x1xf32> to vector<16x128xf32>
    %15 = arith.subf %11, %14 : vector<16x128xf32>
    %16 = math.exp %15 : vector<16x128xf32>
    %cst_8 = arith.constant dense<0.000000e+00> : vector<16xf32>
    %17 = vector.multi_reduction <add>, %16, %cst_8 [1] : vector<16x128xf32> to vector<16xf32>
    %18 = vector.shape_cast %17 : vector<16xf32> to vector<16x1xf32>
    %19 = tpu.reciprocal %18 {approx = true} : vector<16x1xf32> -> vector<16x1xf32>
    %20 = vector.broadcast %19 : vector<16x1xf32> to vector<16x128xf32>
    %21 = arith.mulf %16, %20 : vector<16x128xf32>
    %22 = arith.truncf %21 : vector<16x128xf32> to vector<16x128xbf16>
    %cst_9 = arith.constant dense<0.000000e+00> : vector<32x128xf32>
    %23 = tpu.matmul %8, %22, %cst_9 {dimension_numbers = #tpu.dot_dimension_numbers<[0], [0], [1], [1], [0, 1, 1, 1], [], []>} : vector<16x32xbf16>, vector<16x128xbf16>, vector<32x128xf32> -> vector<32x128xf32>
    %24 = arith.index_cast %c0_i32_4 : i32 to index
    %c0_10 = arith.constant 0 : index
    %c0_11 = arith.constant 0 : index
    %25 = vector.load %arg6[%24, %c0_10, %c0_11] : memref<1x32x128xf32, #tpu.memory_space<vmem>>, vector<1x32x128xf32>
    %26 = vector.shape_cast %25 : vector<1x32x128xf32> to vector<32x128xf32>
    %27 = arith.addf %26, %23 : vector<32x128xf32>
    %28 = arith.index_cast %c0_i32_4 : i32 to index
    %c0_12 = arith.constant 0 : index
    %c0_13 = arith.constant 0 : index
    %29 = vector.load %arg6[%28, %c0_12, %c0_13] : memref<1x32x128xf32, #tpu.memory_space<vmem>>, vector<1x32x128xf32>
    %30 = vector.shape_cast %29 : vector<1x32x128xf32> to vector<32x128xf32>
    %31 = vector.shape_cast %27 : vector<32x128xf32> to vector<1x32x128xf32>
    tpu.vector_store %arg6[%28, %c0_12, %c0_13], %31 {strides = array<i32>} : memref<1x32x128xf32, #tpu.memory_space<vmem>>, vector<1x32x128xf32>,
    %32 = arith.index_cast %c0_i32_4 : i32 to index
    %c0_14 = arith.constant 0 : index
    %c0_15 = arith.constant 0 : index
    %33 = vector.load %arg7[%32, %c0_14, %c0_15] : memref<1x1x128xf32, #tpu.memory_space<vmem>>, vector<1x1x128xf32>
    %34 = vector.shape_cast %33 : vector<1x1x128xf32> to vector<1x128xf32>
    %cst_16 = arith.constant dense<0.000000e+00> : vector<128xf32>
    %35 = vector.multi_reduction <add>, %21, %cst_16 [0] : vector<16x128xf32> to vector<128xf32>
    %36 = vector.shape_cast %35 : vector<128xf32> to vector<1x128xf32>
    %37 = arith.addf %34, %36 : vector<1x128xf32>
    %38 = arith.index_cast %c0_i32_4 : i32 to index
    %c0_17 = arith.constant 0 : index
    %c0_18 = arith.constant 0 : index
    %39 = vector.load %arg7[%38, %c0_17, %c0_18] : memref<1x1x128xf32, #tpu.memory_space<vmem>>, vector<1x1x128xf32>
    %40 = vector.shape_cast %39 : vector<1x1x128xf32> to vector<1x128xf32>
    %41 = vector.shape_cast %37 : vector<1x128xf32> to vector<1x1x128xf32>
    tpu.vector_store %arg7[%38, %c0_17, %c0_18], %41 {strides = array<i32>} : memref<1x1x128xf32, #tpu.memory_space<vmem>>, vector<1x1x128xf32>,
    %c1_i32 = arith.constant 1 : i32
    %c0_i32_19 = arith.constant 0 : i32
    %42 = arith.cmpi eq, %arg1, %c0_i32_19 : i32
    %43 = arith.extui %42 : i1 to i32
    %c0_i32_20 = arith.constant 0 : i32
    %44 = arith.cmpi ne, %43, %c0_i32_20 : i32
    scf.if %44 {
      %c0_21 = arith.constant 0 : index
      %c0_22 = arith.constant 0 : index
      %45 = vector.load %arg5[%c0_21, %c0_22] : memref<32x128xbf16, #tpu.memory_space<vmem>>, vector<32x128xbf16>
      %46 = arith.extf %45 : vector<32x128xbf16> to vector<32x128xf32>
      %c0_i32_23 = arith.constant 0 : i32
      %47 = arith.index_cast %c0_i32_23 : i32 to index
      %c0_24 = arith.constant 0 : index
      %c0_25 = arith.constant 0 : index
      %48 = vector.load %arg7[%47, %c0_24, %c0_25] : memref<1x1x128xf32, #tpu.memory_space<vmem>>, vector<1x1x128xf32>
      %49 = vector.shape_cast %48 : vector<1x1x128xf32> to vector<1x128xf32>
      %50 = vector.broadcast %49 : vector<1x128xf32> to vector<32x128xf32>
      %51 = arith.mulf %50, %46 : vector<32x128xf32>
      %52 = arith.index_cast %c0_i32_23 : i32 to index
      %c0_26 = arith.constant 0 : index
      %c0_27 = arith.constant 0 : index
      %53 = vector.load %arg6[%52, %c0_26, %c0_27] : memref<1x32x128xf32, #tpu.memory_space<vmem>>, vector<1x32x128xf32>
      %54 = vector.shape_cast %53 : vector<1x32x128xf32> to vector<32x128xf32>
      %55 = arith.subf %54, %51 : vector<32x128xf32>
      %56 = arith.mulf %55, %55 : vector<32x128xf32>
      %cst_28 = arith.constant dense<0.000000e+00> : vector<128xf32>
      %57 = vector.multi_reduction <add>, %56, %cst_28 [0] : vector<32x128xf32> to vector<128xf32>
      %58 = vector.shape_cast %57 : vector<128xf32> to vector<1x128xf32>
      %cst_29 = arith.constant 1.000000e-24 : f32
      %59 = vector.broadcast %cst_29 : f32 to vector<1x128xf32>
      %60 = arith.maximumf %58, %59 : vector<1x128xf32>
      %61 = math.rsqrt %60 : vector<1x128xf32>
      %62 = vector.broadcast %61 : vector<1x128xf32> to vector<32x128xf32>
      %63 = arith.mulf %55, %62 : vector<32x128xf32>
      %64 = arith.mulf %58, %61 : vector<1x128xf32>
      %65 = arith.mulf %64, %61 : vector<1x128xf32>
      %66 = vector.shape_cast %65 : vector<1x128xf32> to vector<1x1x128xf32>
      %cst_30 = arith.constant dense<0.000000e+00> : vector<1xf32>
      %67 = vector.multi_reduction <add>, %66, %cst_30 [1, 2] : vector<1x1x128xf32> to vector<1xf32>
      %68 = vector.shape_cast %67 : vector<1xf32> to vector<1x1x1xf32>
      %69 = vector.extract %68[0, 0, 0] : f32 from vector<1x1x1xf32>
      %cst_31 = arith.constant 1.000000e-24 : f32
      %70 = arith.maximumf %69, %cst_31 : f32
      %71 = math.rsqrt %70 : f32
      %72 = vector.broadcast %71 : f32 to vector<32x128xf32>
      %73 = arith.mulf %63, %72 : vector<32x128xf32>
      %74 = arith.index_cast %c0_i32_23 : i32 to index
      %c0_32 = arith.constant 0 : index
      %c0_33 = arith.constant 0 : index
      %75 = vector.load %arg6[%74, %c0_32, %c0_33] : memref<1x32x128xf32, #tpu.memory_space<vmem>>, vector<1x32x128xf32>
      %76 = vector.shape_cast %75 : vector<1x32x128xf32> to vector<32x128xf32>
      %77 = vector.shape_cast %73 : vector<32x128xf32> to vector<1x32x128xf32>
      tpu.vector_store %arg6[%74, %c0_32, %c0_33], %77 {strides = array<i32>} : memref<1x32x128xf32, #tpu.memory_space<vmem>>, vector<1x32x128xf32>,
      %c1_i32_34 = arith.constant 1 : i32
    } else {
    }
    return
  }
  func.func @transform_0(%arg0: i32, %arg1: i32) -> (i32, i32, i32) {
    %c0_i32 = arith.constant 0 : i32
    %c0_i32_0 = arith.constant 0 : i32
    return %arg0, %arg1, %c0_i32 : i32, i32, i32
  }
  func.func @transform_1(%arg0: i32, %arg1: i32) -> (i32, i32) {
    %c0_i32 = arith.constant 0 : i32
    %c0_i32_0 = arith.constant 0 : i32
    %c0_i32_1 = arith.constant 0 : i32
    return %c0_i32, %c0_i32_0 : i32, i32
  }
  func.func @transform_2(%arg0: i32, %arg1: i32) -> (i32, i32) {
    %c0_i32 = arith.constant 0 : i32
    %c0_i32_0 = arith.constant 0 : i32
    %c0_i32_1 = arith.constant 0 : i32
    return %c0_i32, %c0_i32_0 : i32, i32
  }
  func.func @transform_3(%arg0: i32, %arg1: i32) -> (i32, i32) {
    %c0_i32 = arith.constant 0 : i32
    %c0_i32_0 = arith.constant 0 : i32
    %c0_i32_1 = arith.constant 0 : i32
    return %c0_i32, %c0_i32_0 : i32, i32
  }
  func.func @transform_4(%arg0: i32, %arg1: i32) -> (i32, i32, i32) {
    %c0_i32 = arith.constant 0 : i32
    %c0_i32_0 = arith.constant 0 : i32
    %c0_i32_1 = arith.constant 0 : i32
    return %arg0, %c0_i32, %c0_i32_0 : i32, i32, i32
  }
}

</mosaic_0001>

<llo_original>
// kernel: tpu_custom_call.1
$region0: #{tpu_custom_call.1}
  #allocation0 [shape = 'u32[]', space=smem, size = 0x4, offset = 0x4, fixed_abs, tag = 'smem constant byte address 0x4 - core index']
  #allocation1 [shape = 'u32[72,128]{1,0:T(1,128)}', space=vmem, size = 0x9000, scoped, tag = 'internal scratch']
  #allocation2 [shape = 'f32[1,1,128]{2,1,0:T(1,128)}', space=vmem, size = 0x200, scoped, tag = 'scratch operand']
  %s0 = inlined_call_operand.hbm [shape: f32[2,16,32], index: 0, kind: input, shape index: {}]
  %s1 = inlined_call_operand.hbm [shape: bf16[32,128], index: 1, kind: input, shape index: {}]
  %s2 = inlined_call_operand.vmem [shape: f32[1,128], index: 2, kind: input, shape index: {}]
  %s3 = inlined_call_operand.hbm [shape: bf16[32,128], index: 3, kind: input, shape index: {}]
  %s4 = inlined_call_operand.hbm [shape: f32[2,32,128], index: 4, kind: output, shape index: {}]
  %s5 = sld [smem:[#allocation0]]
  $region69: #{tpu_custom_call.1} parent=0
    _
  %s7 = ssub.s32 1, %s5
  %s8 = scalar_select 0, %s7, %s5
  $region1: #{tpu_custom_call.1} parent=0
    #allocation3 [shape = 'u8[16384]{0}', space=vmem, size = 0x4000, scoped, tag = 'input window, operand 0']
    #allocation4 [shape = 's32[2]{0}', space=sflag, size = 0x8, scoped, tag = 'scoped memory for tpu_custom_call.1']
    #allocation5 [shape = 's32[2]{0}', space=sflag, size = 0x8, scoped, tag = 'scoped memory for tpu_custom_call.1']
    #allocation6 [shape = 'u8[8192]{0}', space=vmem, size = 0x2000, scoped, tag = 'input window, operand 1, single buffered']
    #allocation7 [shape = 's32[1]{0}', space=sflag, size = 0x4, scoped, tag = 'scoped memory for tpu_custom_call.1']
    #allocation8 [shape = 'u8[8192]{0}', space=vmem, size = 0x2000, scoped, tag = 'input window, operand 3, single buffered']
    #allocation9 [shape = 'u8[32768]{0}', space=vmem, size = 0x8000, scoped, tag = 'output window, operand 0']
    %9 = vsyncpa [#allocation4], 0
    %s10 = scalar_lea.sflag [#allocation4], 1
    %11 = vsyncpa %s10, 0
    %12 = vsyncpa [#allocation7], 0
    %13 = vsyncpa [#allocation5], 0
    %s14 = scalar_lea.sflag [#allocation5], 1
    %15 = vsyncpa %s14, 0
    loop: start=0, step=1, limit=4
    $region2: #{tpu_custom_call.1} parent=1 // loop_pre_header
      _
    $region3: #{tpu_custom_call.1} parent=1 // loop_header
      %s17 = sphi 0, %s21
      %p18 = scmp.ge.s32.totalorder %s17, 4
      %s24 = sphi 0, %s36
      %s25 = sphi 0, %s32
      %s26 = sphi 0, %s24
      %s27 = sphi 0, %s25
      %s28 = sphi 0, %s26
      %s29 = sphi 0, %s27
      %s41 = sphi 0, %s43
      %s44 = sphi 0, %s41
      %s45 = sphi 0, %s44
      %s61 = sphi 0, %s45
      %s65 = sphi 0, %s65
      %s67 = sphi 0, %s65
      %s68 = sphi 0, %s67
      %s82 = sphi 0, %s68
      %s86 = sphi 0, %s86
      %s88 = sphi 0, %s86
      %s89 = sphi 0, %s88
      %s103 = sphi 0, %s89
      %s107 = sphi 0, %s107
      %s109 = sphi 0, %s107
      %s110 = sphi 0, %s109
      %s124 = sphi 0, %s110
      %s130 = sphi 0, %s132
      %s133 = sphi 0, %s130
      %s134 = sphi 0, %s133
      %s150 = sphi 0, %s134
    $region4: #{tpu_custom_call.1} parent=1 // loop_header_branch
      %20 = sbr.rel (%p18) target = $region8
    $region5: #{tpu_custom_call.1} parent=1 // loop_body
      %s22 = ssub.s32 %s17, 1
      %s23 = ssub.s32 %s17, 2
      %s30 = sadd.s32 1, %s25
      %p31 = scmp.ge.s32.totalorder %s30, 1
      %s32 = scalar_select %p31, 0, %s30
      %s33 = sadd.s32 1, %s24
      %s34 = scalar_select %p31, %s33, %s24
      %p35 = scmp.ge.s32.totalorder %s34, 2
      %s36 = scalar_select %p35, 0, %s34
      %s37 = ssub.s32 %s24, %s36
      %s38 = ssub.s32 %s25, %s32
      %s39 = sor.u32 %s37, %s38
      %p40 = scmp.eq.s32.totalorder %s39, 0
      %s42 = sadd.s32 %s41, 1
      %s43 = scalar_select %p40, %s41, %s42
      %p46 = pneg %p40
      %p47 = scmp.eq.s32.totalorder %s17, 1
      %p48 = por %p46, %p47
      %p49 = scmp.ne.s32.totalorder %s41, %s44
      %p50 = scmp.eq.s32.totalorder %s17, 0
      %p51 = por %p49, %p50
      %p52 = scmp.ne.s32.totalorder %s41, %s44
      %p53 = scmp.eq.s32.totalorder %s22, 1
      %p54 = por %p52, %p53
      %p55 = scmp.ne.s32.totalorder %s44, %s45
      %p56 = scmp.eq.s32.totalorder %s22, 0
      %p57 = por %p55, %p56
      %p58 = scmp.ne.s32.totalorder %s44, %s45
      %p59 = scmp.eq.s32.totalorder %s23, 1
      %p60 = por %p58, %p59
      %p62 = scmp.ne.s32.totalorder %s45, %s61
      %p63 = scmp.eq.s32.totalorder %s23, 0
      %p64 = por %p62, %p63
      %s66 = sadd.s32 %s65, 1
      %p69 = scmp.eq.s32.totalorder %s17, 1
      %p70 = scmp.ne.s32.totalorder %s65, %s67
      %p71 = scmp.eq.s32.totalorder %s17, 0
      %p72 = por %p70, %p71
      %p73 = scmp.ne.s32.totalorder %s65, %s67
      %p74 = scmp.eq.s32.totalorder %s22, 1
      %p75 = por %p73, %p74
      %p76 = scmp.ne.s32.totalorder %s67, %s68
      %p77 = scmp.eq.s32.totalorder %s22, 0
      %p78 = por %p76, %p77
      %p79 = scmp.ne.s32.totalorder %s67, %s68
      %p80 = scmp.eq.s32.totalorder %s23, 1
      %p81 = por %p79, %p80
      %p83 = scmp.ne.s32.totalorder %s68, %s82
      %p84 = scmp.eq.s32.totalorder %s23, 0
      %p85 = por %p83, %p84
      %s87 = sadd.s32 %s86, 1
      %p90 = scmp.eq.s32.totalorder %s17, 1
      %p91 = scmp.ne.s32.totalorder %s86, %s88
      %p92 = scmp.eq.s32.totalorder %s17, 0
      %p93 = por %p91, %p92
      %p94 = scmp.ne.s32.totalorder %s86, %s88
      %p95 = scmp.eq.s32.totalorder %s22, 1
      %p96 = por %p94, %p95
      %p97 = scmp.ne.s32.totalorder %s88, %s89
      %p98 = scmp.eq.s32.totalorder %s22, 0
      %p99 = por %p97, %p98
      %p100 = scmp.ne.s32.totalorder %s88, %s89
      %p101 = scmp.eq.s32.totalorder %s23, 1
      %p102 = por %p100, %p101
      %p104 = scmp.ne.s32.totalorder %s89, %s103
      %p105 = scmp.eq.s32.totalorder %s23, 0
      %p106 = por %p104, %p105
      %s108 = sadd.s32 %s107, 1
      %p111 = scmp.eq.s32.totalorder %s17, 1
      %p112 = scmp.ne.s32.totalorder %s107, %s109
      %p113 = scmp.eq.s32.totalorder %s17, 0
      %p114 = por %p112, %p113
      %p115 = scmp.ne.s32.totalorder %s107, %s109
      %p116 = scmp.eq.s32.totalorder %s22, 1
      %p117 = por %p115, %p116
      %p118 = scmp.ne.s32.totalorder %s109, %s110
      %p119 = scmp.eq.s32.totalorder %s22, 0
      %p120 = por %p118, %p119
      %p121 = scmp.ne.s32.totalorder %s109, %s110
      %p122 = scmp.eq.s32.totalorder %s23, 1
      %p123 = por %p121, %p122
      %p125 = scmp.ne.s32.totalorder %s110, %s124
      %p126 = scmp.eq.s32.totalorder %s23, 0
      %p127 = por %p125, %p126
      %s128 = ssub.s32 %s24, %s36
      %p129 = scmp.eq.s32.totalorder %s128, 0
      %s131 = sadd.s32 %s130, 1
      %s132 = scalar_select %p129, %s130, %s131
      %p135 = pneg %p129
      %p136 = scmp.eq.s32.totalorder %s17, 1
      %p137 = por %p135, %p136
      %p138 = scmp.ne.s32.totalorder %s130, %s133
      %p139 = scmp.eq.s32.totalorder %s17, 0
      %p140 = por %p138, %p139
      %p141 = scmp.ne.s32.totalorder %s130, %s133
      %p142 = scmp.eq.s32.totalorder %s22, 1
      %p143 = por %p141, %p142
      %p144 = scmp.ne.s32.totalorder %s133, %s134
      %p145 = scmp.eq.s32.totalorder %s22, 0
      %p146 = por %p144, %p145
      %p147 = scmp.ne.s32.totalorder %s133, %s134
      %p148 = scmp.eq.s32.totalorder %s23, 1
      %p149 = por %p147, %p148
      %p151 = scmp.ne.s32.totalorder %s134, %s150
      %p152 = scmp.eq.s32.totalorder %s23, 0
      %p153 = por %p151, %p152
      %p154 = scmp.le.s32.totalorder 1, %s17
      %p155 = scmp.lt.s32.totalorder %s17, 3
      %p156 = pnand %p154, %p155
      %p157 = pneg %p156
      // Predicated region
      $region9: #{tpu_custom_call.1} parent=5 // pred_check
        _
      $region10: #{tpu_custom_call.1} parent=5 // pred_check_branch
        %159 = sbr.rel (%p156) target = $region12
      $region11: #{tpu_custom_call.1} parent=5 // pred_region
        %s160 = ssub.s32 %s17, 1
        // Predicated region
        $region13: #{tpu_custom_call.1} parent=11 // pred_check
          %p161 = pneg %p78
        $region14: #{tpu_custom_call.1} parent=11 // pred_check_branch
          %163 = sbr.rel (%p161) target = $region16
        $region15: #{tpu_custom_call.1} parent=11 // pred_region
          %165 = vsyncadd [#allocation7], 0
          %s166 = sshll.u32 %s1, 4
          %s167 = int_to_ptr.hbm [resolvable:$true] %s166
          %s168 = sshll.u32 [#allocation6], 4
          %s169 = int_to_ptr.vmem [resolvable:$true] %s168
          %174 = dma.hbm_to_vmem [thread:$0]  %s167, 256, %s169, [#allocation7], 64, 64, 4
        $region16: #{tpu_custom_call.1} parent=11 // pred_fallthru
          _
        // Predicated region
        $region17: #{tpu_custom_call.1} parent=11 // pred_check
          %p175 = pneg %p99
        $region18: #{tpu_custom_call.1} parent=11 // pred_check_branch
          %177 = sbr.rel (%p175) target = $region20
        $region19: #{tpu_custom_call.1} parent=11 // pred_region
          _
        $region20: #{tpu_custom_call.1} parent=11 // pred_fallthru
          _
        // Predicated region
        $region21: #{tpu_custom_call.1} parent=11 // pred_check
          %p178 = pneg %p120
        $region22: #{tpu_custom_call.1} parent=11 // pred_check_branch
          %180 = sbr.rel (%p178) target = $region24
        $region23: #{tpu_custom_call.1} parent=11 // pred_region
          %182 = vsyncadd [#allocation7], 0
          %s183 = sshll.u32 %s3, 4
          %s184 = int_to_ptr.hbm [resolvable:$true] %s183
          %s185 = sshll.u32 [#allocation8], 4
          %s186 = int_to_ptr.vmem [resolvable:$true] %s185
          %191 = dma.hbm_to_vmem [thread:$0]  %s184, 256, %s186, [#allocation7], 64, 64, 4
        $region24: #{tpu_custom_call.1} parent=11 // pred_fallthru
          _
      $region12: #{tpu_custom_call.1} parent=5 // pred_fallthru
        _
      %p192 = scmp.lt.s32.totalorder %s17, 2
      // Predicated region
      $region25: #{tpu_custom_call.1} parent=5 // pred_check
        %p193 = pneg %p192
      $region26: #{tpu_custom_call.1} parent=5 // pred_check_branch
        %195 = sbr.rel (%p193) target = $region28
      $region27: #{tpu_custom_call.1} parent=5 // pred_region
        // Predicated region
        $region29: #{tpu_custom_call.1} parent=27 // pred_check
          %p196 = pneg %p51
        $region30: #{tpu_custom_call.1} parent=27 // pred_check_branch
          %198 = sbr.rel (%p196) target = $region32
        $region31: #{tpu_custom_call.1} parent=27 // pred_region
          %s199 = sand.u32 %s41, 1
          %s200 = scalar_lea.sflag [#allocation4], %s199
          %s201 = sand.u32 %s41, 1
          %s202 = smul.addr %s201, 16
          %s203 = scalar_lea.vmem [#allocation3], %s202
          %s204 = smul.u32 2, %s25
          %206 = vsyncadd %s200, 0
          %s207 = smul.addr %s24, 2
          %s208 = sadd.s32 %s204, %s207
          %s209 = smul.addr %s208, 8
          %s210 = scalar_lea.hbm %s0, %s209
          %s211 = sshll.u32 %s210, 4
          %s212 = int_to_ptr.hbm [resolvable:$true] %s211
          %s213 = sshll.u32 %s203, 4
          %s214 = int_to_ptr.vmem [resolvable:$true] %s213
          %219 = dma.hbm_to_vmem [thread:$0]  %s212, 256, %s214, %s200, 128, 128, 8
        $region32: #{tpu_custom_call.1} parent=27 // pred_fallthru
          _
      $region28: #{tpu_custom_call.1} parent=5 // pred_fallthru
        _
      %p220 = scmp.le.s32.totalorder 1, %s17
      %p221 = scmp.lt.s32.totalorder %s17, 3
      %p222 = pnand %p220, %p221
      %p223 = pneg %p222
      // Predicated region
      $region33: #{tpu_custom_call.1} parent=5 // pred_check
        _
      $region34: #{tpu_custom_call.1} parent=5 // pred_check_branch
        %225 = sbr.rel (%p222) target = $region36
      $region35: #{tpu_custom_call.1} parent=5 // pred_region
        %s226 = ssub.s32 %s17, 1
        %s227 = sand.u32 %s44, 1
        %s228 = scalar_lea.sflag [#allocation4], %s227
        %s229 = sand.u32 %s44, 1
        %s230 = smul.addr %s229, 16
        %s231 = scalar_lea.vmem [#allocation3], %s230
        // Predicated region
        $region37: #{tpu_custom_call.1} parent=35 // pred_check
          %p232 = pneg %p57
        $region38: #{tpu_custom_call.1} parent=35 // pred_check_branch
          %234 = sbr.rel (%p232) target = $region40
        $region39: #{tpu_custom_call.1} parent=35 // pred_region
          %236 = dma.done %s228, 256
        $region40: #{tpu_custom_call.1} parent=35 // pred_fallthru
          _
        // Predicated region
        $region41: #{tpu_custom_call.1} parent=35 // pred_check
          %p237 = pneg %p78
        $region42: #{tpu_custom_call.1} parent=35 // pred_check_branch
          %239 = sbr.rel (%p237) target = $region44
        $region43: #{tpu_custom_call.1} parent=35 // pred_region
          %241 = dma.done [#allocation7], 256
        $region44: #{tpu_custom_call.1} parent=35 // pred_fallthru
          _
        // Predicated region
        $region45: #{tpu_custom_call.1} parent=35 // pred_check
          %p242 = pneg %p120
        $region46: #{tpu_custom_call.1} parent=35 // pred_check_branch
          %244 = sbr.rel (%p242) target = $region48
        $region47: #{tpu_custom_call.1} parent=35 // pred_region
          %246 = dma.done [#allocation7], 256
        $region48: #{tpu_custom_call.1} parent=35 // pred_fallthru
          _
        %s247 = sand.u32 %s44, 1
        %s248 = scalar_lea.sflag [#allocation4], %s247
        %s249 = sand.u32 %s44, 1
        %s250 = smul.addr %s249, 16
        %s251 = scalar_lea.vmem [#allocation3], %s250
        %p252 = pneg %p57
        %p253 = pneg %p54
        %p254 = pneg %p78
        %p255 = pneg %p75
        %p256 = pneg %p99
        %p257 = pneg %p96
        %p258 = pneg %p120
        %p259 = pneg %p117
        %p260 = pneg %p146
        %p261 = pneg %p143
        %s262 = sand.u32 %s133, 1
        %s263 = scalar_lea.sflag [#allocation5], %s262
        %s264 = sand.u32 %s133, 1
        %s265 = smul.addr %s264, 32
        %s266 = scalar_lea.vmem [#allocation9], %s265
        %s267 = smul.u32 2, %s27
        %p269 = scmp.eq.s32.totalorder %s27, 0
        // Predicated region
        $region49: #{tpu_custom_call.1} parent=35 // pred_check
          %p270 = pneg %p269
        $region50: #{tpu_custom_call.1} parent=35 // pred_check_branch
          %272 = sbr.rel (%p270) target = $region52
        $region51: #{tpu_custom_call.1} parent=35 // pred_region
          %273 = vst [vmem:[%s266] sm:$0xff] 0.0
          %274 = vst [vmem:[%s266 + $0x8] sm:$0xff] 0.0
          %275 = vst [vmem:[%s266 + $0x10] sm:$0xff] 0.0
          %276 = vst [vmem:[%s266 + $0x18] sm:$0xff] 0.0
          %277 = vst [vmem:[#allocation2] sm:$0x1] 0.0
        $region52: #{tpu_custom_call.1} parent=35 // pred_fallthru
          _
        %v278 = vld [vmem:[#allocation6] sm:$0xf]
        %v279 = vld [vmem:[#allocation6 + $0x4] sm:$0xf]
        %v280 = vld [vmem:[#allocation6 + $0x8] sm:$0xf]
        %v281 = vld [vmem:[#allocation6 + $0xc] sm:$0xf]
        %v282 = vld [vmem:[%s2] sm:$0x1]
        %v283 = vld [vmem:[%s231] sm:$0xff]
        %v284 = vld [vmem:[%s231 + $0x8] sm:$0xff]
        %v285 = vpack.c.bf16 %v284, %v283
        %v287 = vperm.slane %v282, 0
        %v293 = vunpack.c.l.b16 %v278
        %v294 = vunpack.c.l.b16 %v279
        %v295 = vunpack.c.l.b16 %v280
        %v296 = vunpack.c.l.b16 %v281
        %v297 = vpack.c.b16 %v294, %v293
        %v298 = vpack.c.b16 %v296, %v295
        %vm301 = vcmask 261120
        %v303 = vsel %vm301, %v285, 0
        %305 = vmatpush.bf16.msra.mxu0 0
        %306 = vmatpush.bf16.msra.mxu0 0
        %307 = vmatpush.bf16.msra.mxu0 0
        %308 = vmatpush.bf16.msra.mxu0 0
        %309 = vmatpush.bf16.msra.mxu0 0
        %310 = vmatpush.bf16.msra.mxu0 0
        %311 = vmatpush.bf16.msra.mxu0 %v298
        %312 = vmatpush.bf16.msra.mxu0 %v297
        %313 = vmatmul.bf16.gmra.mxu0 %v303
        %v314 = vpop.f32.mrf.mxu0
        %v315 = vadd.f32 %v287, %v314
        %v316 = vpop.f32.mrf.mxu0
        %v317 = vadd.f32 %v287, %v316
        %318 = vdwg.mxu0
        %319 = vmax.xlane.f32.xlu0 %v315
        %v320 = vpop.xlane.xlu0 %319
        %321 = vmax.xlane.f32.xlu0 %v317
        %v322 = vpop.xlane.xlu0 %321
        %v323 = vsub.f32 %v315, %v320
        %v324 = vsub.f32 %v317, %v322
        %v325 = vmul.f32 %v323, 1.442695
        %v326 = vpow.pop %v325
        %v327 = vmul.f32 %v324, 1.442695
        %v328 = vpow.pop %v327
        %329 = vadd.xlane.f32.xlu0 %v326
        %v330 = vpop.xlane.xlu0 %329
        %331 = vadd.xlane.f32.xlu0 %v328
        %v332 = vpop.xlane.xlu0 %331
        %v333 = vrcp.pop %v330
        %v334 = vrcp.pop %v332
        %v335 = vmul.f32 %v326, %v333
        %v336 = vmul.f32 %v328, %v334
        %v337 = vpack.c.bf16 %v336, %v335
        %338 = vxpose.xlu0.c.b16.start [1/8] %v285, 128
        %339 = vxpose.xlu0.c.b16.cont [2/8] 0, 128
        %340 = vxpose.xlu0.c.b16.cont [3/8] 0, 128
        %341 = vxpose.xlu0.c.b16.cont [4/8] 0, 128
        %342 = vxpose.xlu0.c.b16.cont [5/8] 0, 128
        %343 = vxpose.xlu0.c.b16.cont [6/8] 0, 128
        %344 = vxpose.xlu0.c.b16.cont [7/8] 0, 128
        %345 = vxpose.xlu0.c.b16.end [8/8] 0, 128
        %v346 = vpop.trf.xlu0
        %v347 = vpop.trf.xlu0
        %v348 = vpop.trf.xlu0
        %v349 = vpop.trf.xlu0
        %v350 = vpop.trf.xlu0
        %v351 = vpop.trf.xlu0
        %v352 = vpop.trf.xlu0
        %v353 = vpop.trf.xlu0
        %vm354 = vcmask 130048
        %v356 = vsel %vm354, %v346, 0
        %v359 = vsel %vm354, %v347, 0
        %361 = vmatpush.bf16.msra.mxu0 0
        %362 = vmatpush.bf16.msra.mxu0 0
        %363 = vmatpush.bf16.msra.mxu0 0
        %364 = vmatpush.bf16.msra.mxu0 0
        %365 = vmatpush.bf16.msra.mxu0 0
        %366 = vmatpush.bf16.msra.mxu0 0
        %367 = vmatpush.bf16.msra.mxu0 0
        %368 = vmatpush.bf16.msra.mxu0 %v337
        %369 = vmatmul.bf16.gmra.mxu0 %v356
        %v370 = vpop.f32.mrf.mxu0
        %v371 = vadd.f32 0.0, %v370
        %v372 = vpop.f32.mrf.mxu0
        %v373 = vadd.f32 0.0, %v372
        %374 = vmatmul.bf16.gmra.mxu0 %v359
        %v375 = vpop.f32.mrf.mxu0
        %v376 = vadd.f32 0.0, %v375
        %v377 = vpop.f32.mrf.mxu0
        %v378 = vadd.f32 0.0, %v377
        %379 = vdwg.mxu0
        %v380 = vld [vmem:[%s266] sm:$0xff]
        %v381 = vld [vmem:[%s266 + $0x8] sm:$0xff]
        %v382 = vld [vmem:[%s266 + $0x10] sm:$0xff]
        %v383 = vld [vmem:[%s266 + $0x18] sm:$0xff]
        %v384 = vadd.f32 %v380, %v371
        %v385 = vadd.f32 %v381, %v373
        %v386 = vadd.f32 %v382, %v376
        %v387 = vadd.f32 %v383, %v378
        %388 = vst [vmem:[%s266] sm:$0xff] %v384
        %389 = vst [vmem:[%s266 + $0x8] sm:$0xff] %v385
        %390 = vst [vmem:[%s266 + $0x10] sm:$0xff] %v386
        %391 = vst [vmem:[%s266 + $0x18] sm:$0xff] %v387
        %v392 = vld [vmem:[#allocation2] sm:$0x1]
        %v393 = vadd.f32 %v335, %v336
        %v394 = vrot.slane %v393, 4
        %v395 = vadd.f32 %v393, %v394
        %v396 = vrot.slane %v395, 2
        %v397 = vadd.f32 %v395, %v396
        %v398 = vrot.slane %v397, 1
        %v399 = vadd.f32 %v397, %v398
        %v400 = vadd.f32 %v392, %v399
        %401 = vst [vmem:[#allocation2] sm:$0x1] %v400
        // Predicated region
        $region53: #{tpu_custom_call.1} parent=35 // pred_check
          %p402 = pneg %p269
        $region54: #{tpu_custom_call.1} parent=35 // pred_check_branch
          %404 = sbr.rel (%p402) target = $region56
        $region55: #{tpu_custom_call.1} parent=35 // pred_region
          %v405 = vld [vmem:[#allocation8] sm:$0xf]
          %v406 = vld [vmem:[#allocation8 + $0x4] sm:$0xf]
          %v407 = vld [vmem:[#allocation8 + $0x8] sm:$0xf]
          %v408 = vld [vmem:[#allocation8 + $0xc] sm:$0xf]
          %v409 = vunpack.c.l.bf16 %v405
          %v410 = vunpack.c.l.bf16 %v406
          %v411 = vunpack.c.l.bf16 %v407
          %v412 = vunpack.c.l.bf16 %v408
          %v413 = vld [vmem:[#allocation2] sm:$0x1]
          %v415 = vperm.slane %v413, 0
          %v417 = vmul.f32 %v415, %v409
          %v418 = vmul.f32 %v415, %v410
          %v419 = vmul.f32 %v415, %v411
          %v420 = vmul.f32 %v415, %v412
          %v421 = vld [vmem:[%s266] sm:$0xff]
          %v422 = vld [vmem:[%s266 + $0x8] sm:$0xff]
          %v423 = vld [vmem:[%s266 + $0x10] sm:$0xff]
          %v424 = vld [vmem:[%s266 + $0x18] sm:$0xff]
          %v425 = vsub.f32 %v421, %v417
          %v426 = vsub.f32 %v422, %v418
          %v427 = vsub.f32 %v423, %v419
          %v428 = vsub.f32 %v424, %v420
          %v429 = vmul.f32 %v425, %v425
          %v430 = vmul.f32 %v426, %v426
          %v431 = vmul.f32 %v427, %v427
          %v432 = vmul.f32 %v428, %v428
          %v433 = vadd.f32 %v429, %v430
          %v434 = vadd.f32 %v433, %v431
          %v435 = vadd.f32 %v434, %v432
          %v436 = vrot.slane %v435, 4
          %v437 = vadd.f32 %v435, %v436
          %v438 = vrot.slane %v437, 2
          %v439 = vadd.f32 %v437, %v438
          %v440 = vrot.slane %v439, 1
          %v441 = vadd.f32 %v439, %v440
          %v442 = vmax.f32 %v441, 1e-24
          %v443 = vrsqrt.pop %v442
          %v444 = vmul.f32 %v443, %v442
          %v445 = vmul.f32 %v444, %v443
          %v446 = vmul.f32 0.5, %v445
          %v447 = vsub.f32 1.5, %v446
          %v448 = vmul.f32 %v443, %v447
          %vm449 = vweird.f32 %v442
          %vm450 = vweird.f32 %v443
          %vm451 = vmor %vm449, %vm450
          %v452 = vsel %vm451, %v443, %v448
          %v453 = vmul.f32 %v425, %v452
          %v454 = vmul.f32 %v426, %v452
          %v455 = vmul.f32 %v427, %v452
          %v456 = vmul.f32 %v428, %v452
          %v457 = vmul.f32 %v441, %v452
          %v458 = vmul.f32 %v457, %v452
          %vm459 = vcmask 1040384
          %v460 = vsel %vm459, %v458, 0.0
          %461 = vadd.xlane.f32.xlu0 %v460
          %v462 = vpop.xlane.xlu0 %461
          %v463 = vrot.slane %v462, 4
          %v464 = vadd.f32 %v462, %v463
          %v465 = vrot.slane %v464, 2
          %v466 = vadd.f32 %v464, %v465
          %v467 = vrot.slane %v466, 1
          %v468 = vadd.f32 %v466, %v467
          %s469 = vtos %v468
          %s470 = smax.f32 %s469, 1e-24
          %v471 = vstv %s470
          %v472 = vrsqrt.pop %v471
          %v473 = vmul.f32 %v472, %v471
          %v474 = vmul.f32 %v473, %v472
          %v475 = vmul.f32 0.5, %v474
          %v476 = vsub.f32 1.5, %v475
          %v477 = vmul.f32 %v472, %v476
          %vm478 = vweird.f32 %v471
          %vm479 = vweird.f32 %v472
          %vm480 = vmor %vm478, %vm479
          %v481 = vsel %vm480, %v472, %v477
          %s482 = vtos %v481
          %v483 = vstv %s482
          %v484 = vmul.f32 %v453, %v483
          %v485 = vmul.f32 %v454, %v483
          %v486 = vmul.f32 %v455, %v483
          %v487 = vmul.f32 %v456, %v483
          %488 = vst [vmem:[%s266] sm:$0xff] %v484
          %489 = vst [vmem:[%s266 + $0x8] sm:$0xff] %v485
          %490 = vst [vmem:[%s266 + $0x10] sm:$0xff] %v486
          %491 = vst [vmem:[%s266 + $0x18] sm:$0xff] %v487
        $region56: #{tpu_custom_call.1} parent=35 // pred_fallthru
          _
        %s492 = sand.u32 %s133, 1
        %s493 = scalar_lea.sflag [#allocation5], %s492
        %s494 = sand.u32 %s133, 1
        %s495 = smul.addr %s494, 32
        %s496 = scalar_lea.vmem [#allocation9], %s495
        // Predicated region
        $region57: #{tpu_custom_call.1} parent=35 // pred_check
          %p497 = pneg %p143
        $region58: #{tpu_custom_call.1} parent=35 // pred_check_branch
          %499 = sbr.rel (%p497) target = $region60
        $region59: #{tpu_custom_call.1} parent=35 // pred_region
          %501 = vsyncadd %s493, 0
          %s502 = smul.addr %s26, 4
          %s503 = smul.addr %s502, 8
          %s504 = scalar_lea.hbm %s4, %s503
          %s505 = sshll.u32 %s496, 4
          %s506 = int_to_ptr.vmem [resolvable:$true] %s505
          %s507 = sshll.u32 %s504, 4
          %s508 = int_to_ptr.hbm [resolvable:$true] %s507
          %513 = dma.vmem_to_hbm [thread:$0]  %s506, 512, %s508, %s493, 128, 128, 8
        $region60: #{tpu_custom_call.1} parent=35 // pred_fallthru
          _
      $region36: #{tpu_custom_call.1} parent=5 // pred_fallthru
        _
      %p514 = scmp.le.s32.totalorder 2, %s17
      // Predicated region
      $region61: #{tpu_custom_call.1} parent=5 // pred_check
        %p515 = pneg %p514
      $region62: #{tpu_custom_call.1} parent=5 // pred_check_branch
        %517 = sbr.rel (%p515) target = $region64
      $region63: #{tpu_custom_call.1} parent=5 // pred_region
        %s518 = ssub.s32 %s17, 2
        // Predicated region
        $region65: #{tpu_custom_call.1} parent=63 // pred_check
          %p519 = pneg %p149
        $region66: #{tpu_custom_call.1} parent=63 // pred_check_branch
          %521 = sbr.rel (%p519) target = $region68
        $region67: #{tpu_custom_call.1} parent=63 // pred_region
          %s522 = sand.u32 %s134, 1
          %s523 = scalar_lea.sflag [#allocation5], %s522
          %s524 = sand.u32 %s134, 1
          %s525 = smul.addr %s524, 32
          %s526 = scalar_lea.vmem [#allocation9], %s525
          %528 = dma.done %s523, 512
        $region68: #{tpu_custom_call.1} parent=63 // pred_fallthru
          _
      $region64: #{tpu_custom_call.1} parent=5 // pred_fallthru
        _
    $region6: #{tpu_custom_call.1} parent=1 // loop_footer
      %s21 = sadd.s32 1, %s17
    $region7: #{tpu_custom_call.1} parent=1 // loop_footer_branch
      %16 = sbr.rel target = $region3
    $region8: #{tpu_custom_call.1} parent=1 // loop_exit
      _
    %529 = vsyncpa [#allocation4], 1
    %s530 = scalar_lea.sflag [#allocation4], 1
    %531 = vsyncpa %s530, 1
    %532 = vsyncpa [#allocation7], 1
    %533 = vsyncpa [#allocation5], 1
    %s534 = scalar_lea.sflag [#allocation5], 1
    %535 = vsyncpa %s534, 1

</llo_original>
